<compile_context>
chip_gen: v6e
topology: v6e:2x2x1
jax: 0.10.0
libtpu: 0.0.40
codegen_flags: <defaults>
</compile_context>

<pallas_src>
import functools

import jax
import jax.numpy as jnp
from jax import lax
from jax.experimental import pallas as pl
from jax.experimental.pallas import tpu as pltpu


_LANE = 128          # lane width
_COL_CHUNK = 1024    # lanes per in-kernel reduction chunk (bounds f32 upcast live range)


def _round_up(x, m):
    return ((x + m - 1) // m) * m


def _sublane_pack(itemsize):
    # sublane packing: f32 -> 8, bf16/f16 -> 16, int8/fp8 -> 32
    return 8 * max(1, 4 // int(itemsize))


def _vmem_capacity_bytes():
    try:
        cap = getattr(pltpu.get_tpu_info(), "vmem_capacity_bytes", None)
        if cap:
            return int(cap)
    except Exception:
        pass
    return 64 * 1024 * 1024   # conservative default (v7x per-TensorCore)


def _choose_tiles(rows, hw, itemsize):
    """Pick (tm, thw, vmem_limit_bytes) for the (rows, hw) flattened view."""
    vmem_cap = _vmem_capacity_bytes()
    pack = _sublane_pack(itemsize)
    hw_pad = _round_up(hw, _LANE)

    # Per-buffer input budget (the pipeline double-buffers it): ~12 MiB on both
    # 64 MiB (v7x) and 128 MiB (v5e/v6e) parts, scaled down for smaller VMEM.
    block_budget = max(2 * 2 ** 20, min(12 * 2 ** 20, vmem_cap // 5))

    # Budget with the padded footprint; for sub-32-bit inputs also reserve room
    # for the f32 reduction intermediate so an up-cast copy can never blow VMEM.
    comp_itemsize = itemsize if itemsize >= 4 else itemsize + 4

    bytes_per_row = hw_pad * comp_itemsize
    rows_cap = block_budget // bytes_per_row
    total_bytes = _round_up(rows, pack) * bytes_per_row

    if rows < 2 * _LANE and total_bytes <= min(block_budget, 2 * 2 ** 20):
        # Tiny, overhead-dominated input: a single block covering everything.
        tm, thw = rows, hw
    elif rows_cap >= _LANE:
        # Full-H*W row tiles (single reduction step).  tm is a multiple of 128
        # so the (2, tm) output block stays lane-dense (unmasked stores).
        cap_tm = (rows_cap // _LANE) * _LANE
        target_tm = _round_up(-(-rows // 4), _LANE)   # aim for >=4 grid steps
        tm = max(_LANE, min(cap_tm, target_tm))
        thw = hw
    else:
        # Large spatial extent: also tile H*W (reduction axis, accumulated in
        # float32 VMEM scratch inside the kernel).
        tm = rows if rows <= _LANE else _LANE
        tm_pad = _round_up(tm, pack)
        thw = (block_budget // (tm_pad * comp_itemsize) // _LANE) * _LANE
        thw = max(_LANE, min(thw, hw_pad))
        if thw >= hw:
            thw = hw

    block_bytes = _round_up(tm, pack) * _round_up(thw, _LANE) * comp_itemsize
    vmem_limit = int(min(vmem_cap * 3 // 4,
                         max(32 * 2 ** 20, 2 * block_bytes + 16 * 2 ** 20)))
    return tm, thw, vmem_limit


def _concat_pool_kernel(x_ref, o_ref, acc_ref, *, hw, thw, needs_mask):
    # x_ref:   (tm, thw) input block (rows x spatial lanes)
    # o_ref:   (2, tm)   lane-dense output block; row 0 = mean, row 1 = max
    # acc_ref: (2, tm)   f32 scratch; row 0 = running sum, row 1 = running max
    k = pl.program_id(1)
    tm = x_ref.shape[0]

    @pl.when(k == 0)
    def _init():
        acc_ref[0, :] = jnp.zeros((tm,), jnp.float32)
        acc_ref[1, :] = jnp.full((tm,), -jnp.inf, jnp.float32)

    part_sum = jnp.zeros((tm,), jnp.float32)
    part_max = jnp.full((tm,), -jnp.inf, jnp.float32)
    base = k * thw                              # global lane offset of this block
    n_chunks = -(-thw // _COL_CHUNK)            # static trip count
    for c in range(n_chunks):                   # trace-time unrolled
        lo = c * _COL_CHUNK
        hi = min(thw, lo + _COL_CHUNK)
        xc = x_ref[:, lo:hi].astype(jnp.float32)          # (tm, <=1024) f32
        if needs_mask:
            lane = lax.broadcasted_iota(jnp.int32, xc.shape, 1) + (base + lo)
            valid = lane < hw
            xs = jnp.where(valid, xc, 0.0)
            xm = jnp.where(valid, xc, -jnp.inf)
        else:
            xs, xm = xc, xc
        part_sum = part_sum + jnp.sum(xs, axis=-1)
        part_max = jnp.maximum(part_max, jnp.max(xm, axis=-1))

    acc_ref[0, :] = acc_ref[0, :] + part_sum
    acc_ref[1, :] = jnp.maximum(acc_ref[1, :], part_max)

    @pl.when(k == pl.num_programs(1) - 1)
    def _finalize():
        inv_hw = jnp.float32(1.0 / hw)
        res = jnp.concatenate(
            [acc_ref[0:1, :] * inv_hw, acc_ref[1:2, :]], axis=0)   # (2, tm) f32
        o_ref[...] = res.astype(o_ref.dtype)    # single lane-dense store


def adaptive_concat_pool2d(x):
    """x: (N, C, H, W) -> (N, 2C, 1, 1); channel order [avg-pooled, max-pooled],
    matching PyTorch AdaptiveAvgPool2d((1,1)) ++ AdaptiveMaxPool2d((1,1))."""
    n, c, h, w = x.shape
    rows, hw = n * c, h * w
    itemsize = jnp.dtype(x.dtype).itemsize

    x_flat = x.reshape(rows, hw)                # contiguous view, no extra HBM pass

    tm, thw, vmem_limit = _choose_tiles(rows, hw, itemsize)
    grid = (pl.cdiv(rows, tm), pl.cdiv(hw, thw))
    needs_mask = (hw % thw) != 0

    kernel = functools.partial(_concat_pool_kernel, hw=hw, thw=thw,
                               needs_mask=needs_mask)

    out = pl.pallas_call(
        kernel,
        out_shape=jax.ShapeDtypeStruct((2, rows), x.dtype),
        grid_spec=pltpu.PrefetchScalarGridSpec(
            num_scalar_prefetch=0,
            grid=grid,
            in_specs=[pl.BlockSpec((tm, thw), lambda i, k: (i, k))],
            out_specs=pl.BlockSpec((2, tm), lambda i, k: (0, i)),
            scratch_shapes=[pltpu.VMEM((2, tm), jnp.float32)]),
        compiler_params=pltpu.CompilerParams(
            dimension_semantics=("parallel", "arbitrary"),
            vmem_limit_bytes=vmem_limit),
        cost_estimate=pl.CostEstimate(
            flops=2 * rows * hw,
            transcendentals=0,
            bytes_accessed=rows * hw * itemsize + 2 * rows * itemsize),
    )(x_flat)

    # Tiny (2, N*C) rearrangement in plain JAX: [avg_channels || max_channels].
    avg = out[0].reshape(n, c)
    mx = out[1].reshape(n, c)
    return jnp.concatenate([avg, mx], axis=1).reshape(n, 2 * c, 1, 1)


def _reference(x):
    avg = jnp.mean(x, axis=(2, 3), keepdims=True)
    mx = jnp.max(x, axis=(2, 3), keepdims=True)
    return jnp.concatenate([avg, mx], axis=1)


if __name__ == "__main__":
    key = jax.random.PRNGKey(0)

    # Small shape consistent with the module: N=2, C=4, H=W=16 (NCHW).
    x = jax.random.normal(key, (2, 4, 16, 16), dtype=jnp.float32)
    y = adaptive_concat_pool2d(x)
    jax.block_until_ready(y)
    assert y.shape == (2, 8, 1, 1), y.shape
    assert jnp.allclose(y, _reference(x), atol=1e-5, rtol=1e-4), "mismatch (small)"

    # Ragged row tiles: rows = 300 -> tm = 128 -> 3 row tiles, last one partial.
    x2 = jax.random.normal(jax.random.PRNGKey(1), (5, 60, 32, 32), jnp.float32)
    y2 = adaptive_concat_pool2d(x2)
    jax.block_until_ready(y2)
    assert y2.shape == (5, 120, 1, 1), y2.shape
    assert jnp.allclose(y2, _reference(x2), atol=1e-5, rtol=1e-4), "mismatch (ragged rows)"

    # Large spatial extent: exercises the H*W reduction axis + lane masking.
    x3 = jax.random.normal(jax.random.PRNGKey(2), (2, 128, 160, 163), jnp.float32)
    y3 = adaptive_concat_pool2d(x3)
    jax.block_until_ready(y3)
    assert y3.shape == (2, 256, 1, 1), y3.shape
    assert jnp.allclose(y3, _reference(x3), atol=1e-5, rtol=1e-4), "mismatch (tiled H*W)"

    print("KERNEL_OK")
</pallas_src>

<mosaic_0001>
module attributes {stable_mosaic.version = 11 : i64} {
  func.func @_concat_pool_kernel(%arg0: i32, %arg1: i32, %arg2: memref<8x256xf32, #tpu.memory_space<vmem>>, %arg3: memref<2x8xf32, #tpu.memory_space<vmem>>, %arg4: memref<2x8xf32, #tpu.memory_space<vmem>>) attributes {dimension_semantics = [#tpu.dimension_semantics<parallel>, #tpu.dimension_semantics<arbitrary>], iteration_bounds = array<i64: 1, 1>, scalar_prefetch = 0 : i64, scratch_operands = 1 : i64, tpu.core_type = #tpu.core_type<tc>, window_params = [{transform_indices = @transform_0, window_bounds = array<i64: 8, 256>}, {transform_indices = @transform_1, window_bounds = array<i64: 2, 8>}]} {
    %c0_i32 = arith.constant 0 : i32
    %0 = arith.cmpi eq, %arg1, %c0_i32 : i32
    %1 = arith.extui %0 : i1 to i32
    %c0_i32_0 = arith.constant 0 : i32
    %2 = arith.cmpi ne, %1, %c0_i32_0 : i32
    scf.if %2 {
      %cst_14 = arith.constant 0.000000e+00 : f32
      %25 = vector.broadcast %cst_14 : f32 to vector<8xf32>
      %c0_15 = arith.constant 0 : index
      %c0_16 = arith.constant 0 : index
      %26 = vector.load %arg4[%c0_15, %c0_16] : memref<2x8xf32, #tpu.memory_space<vmem>>, vector<1x8xf32>
      %27 = vector.shape_cast %26 : vector<1x8xf32> to vector<8xf32>
      %28 = vector.shape_cast %25 : vector<8xf32> to vector<1x8xf32>
      tpu.vector_store %arg4[%c0_15, %c0_16], %28 {strides = array<i32>} : memref<2x8xf32, #tpu.memory_space<vmem>>, vector<1x8xf32>,
      %cst_17 = arith.constant 0xFF800000 : f32
      %29 = vector.broadcast %cst_17 : f32 to vector<8xf32>
      %c1_18 = arith.constant 1 : index
      %c0_19 = arith.constant 0 : index
      %30 = vector.load %arg4[%c1_18, %c0_19] : memref<2x8xf32, #tpu.memory_space<vmem>>, vector<1x8xf32>
      %31 = vector.shape_cast %30 : vector<1x8xf32> to vector<8xf32>
      %32 = vector.shape_cast %29 : vector<8xf32> to vector<1x8xf32>
      tpu.vector_store %arg4[%c1_18, %c0_19], %32 {strides = array<i32>} : memref<2x8xf32, #tpu.memory_space<vmem>>, vector<1x8xf32>,
    } else {
    }
    %cst = arith.constant 0.000000e+00 : f32
    %3 = vector.broadcast %cst : f32 to vector<8xf32>
    %cst_1 = arith.constant 0xFF800000 : f32
    %4 = vector.broadcast %cst_1 : f32 to vector<8xf32>
    %c0 = arith.constant 0 : index
    %c0_2 = arith.constant 0 : index
    %5 = vector.load %arg2[%c0, %c0_2] : memref<8x256xf32, #tpu.memory_space<vmem>>, vector<8x256xf32>
    %cst_3 = arith.constant dense<0.000000e+00> : vector<8xf32>
    %6 = vector.multi_reduction <add>, %5, %cst_3 [1] : vector<8x256xf32> to vector<8xf32>
    %7 = arith.addf %3, %6 : vector<8xf32>
    %cst_4 = arith.constant dense<0xFF800000> : vector<8xf32>
    %8 = vector.multi_reduction <maximumf>, %5, %cst_4 [1] : vector<8x256xf32> to vector<8xf32>
    %9 = arith.maximumf %4, %8 : vector<8xf32>
    %c0_5 = arith.constant 0 : index
    %c0_6 = arith.constant 0 : index
    %10 = vector.load %arg4[%c0_5, %c0_6] : memref<2x8xf32, #tpu.memory_space<vmem>>, vector<1x8xf32>
    %11 = vector.shape_cast %10 : vector<1x8xf32> to vector<8xf32>
    %12 = arith.addf %11, %7 : vector<8xf32>
    %c0_7 = arith.constant 0 : index
    %c0_8 = arith.constant 0 : index
    %13 = vector.load %arg4[%c0_7, %c0_8] : memref<2x8xf32, #tpu.memory_space<vmem>>, vector<1x8xf32>
    %14 = vector.shape_cast %13 : vector<1x8xf32> to vector<8xf32>
    %15 = vector.shape_cast %12 : vector<8xf32> to vector<1x8xf32>
    tpu.vector_store %arg4[%c0_7, %c0_8], %15 {strides = array<i32>} : memref<2x8xf32, #tpu.memory_space<vmem>>, vector<1x8xf32>,
    %c1 = arith.constant 1 : index
    %c0_9 = arith.constant 0 : index
    %16 = vector.load %arg4[%c1, %c0_9] : memref<2x8xf32, #tpu.memory_space<vmem>>, vector<1x8xf32>
    %17 = vector.shape_cast %16 : vector<1x8xf32> to vector<8xf32>
    %18 = arith.maximumf %17, %9 : vector<8xf32>
    %c1_10 = arith.constant 1 : index
    %c0_11 = arith.constant 0 : index
    %19 = vector.load %arg4[%c1_10, %c0_11] : memref<2x8xf32, #tpu.memory_space<vmem>>, vector<1x8xf32>
    %20 = vector.shape_cast %19 : vector<1x8xf32> to vector<8xf32>
    %21 = vector.shape_cast %18 : vector<8xf32> to vector<1x8xf32>
    tpu.vector_store %arg4[%c1_10, %c0_11], %21 {strides = array<i32>} : memref<2x8xf32, #tpu.memory_space<vmem>>, vector<1x8xf32>,
    %c0_i32_12 = arith.constant 0 : i32
    %22 = arith.cmpi eq, %arg1, %c0_i32_12 : i32
    %23 = arith.extui %22 : i1 to i32
    %c0_i32_13 = arith.constant 0 : i32
    %24 = arith.cmpi ne, %23, %c0_i32_13 : i32
    scf.if %24 {
      %c0_14 = arith.constant 0 : index
      %c0_15 = arith.constant 0 : index
      %25 = vector.load %arg4[%c0_14, %c0_15] : memref<2x8xf32, #tpu.memory_space<vmem>>, vector<1x8xf32>
      %cst_16 = arith.constant 3.906250e-03 : f32
      %26 = vector.broadcast %cst_16 : f32 to vector<1x8xf32>
      %27 = arith.mulf %25, %26 : vector<1x8xf32>
      %c1_17 = arith.constant 1 : index
      %c0_18 = arith.constant 0 : index
      %28 = vector.load %arg4[%c1_17, %c0_18] : memref<2x8xf32, #tpu.memory_space<vmem>>, vector<1x8xf32>
      %29 = tpu.concatenate %27, %28 in 0 : vector<1x8xf32>, vector<1x8xf32> -> vector<2x8xf32>
      %c0_19 = arith.constant 0 : index
      %c0_20 = arith.constant 0 : index
      %30 = vector.load %arg3[%c0_19, %c0_20] : memref<2x8xf32, #tpu.memory_space<vmem>>, vector<2x8xf32>
      tpu.vector_store %arg3[%c0_19, %c0_20], %29 {strides = array<i32>} : memref<2x8xf32, #tpu.memory_space<vmem>>, vector<2x8xf32>,
    } else {
    }
    return
  }
  func.func @transform_0(%arg0: i32, %arg1: i32) -> (i32, i32) {
    %c0_i32 = arith.constant 0 : i32
    return %arg0, %arg1 : i32, i32
  }
  func.func @transform_1(%arg0: i32, %arg1: i32) -> (i32, i32) {
    %c0_i32 = arith.constant 0 : i32
    %c0_i32_0 = arith.constant 0 : i32
    return %c0_i32, %arg0 : i32, i32
  }
}

</mosaic_0001>

<llo_original>
// kernel: tpu_custom_call.1
$region0: #{tpu_custom_call.1}
  #allocation0 [shape = 'u32[]', space=smem, size = 0x4, offset = 0x4, fixed_abs, tag = 'smem constant byte address 0x4 - core index']
  #allocation1 [shape = 'u32[144,128]{1,0:T(1,128)}', space=vmem, size = 0x12000, scoped, tag = 'internal scratch']
  #allocation2 [shape = 'f32[2,8]{1,0:T(2,128)}', space=vmem, size = 0x400, scoped, tag = 'scratch operand']
  %s0 = inlined_call_operand.hbm [shape: f32[8,256], index: 0, kind: input, shape index: {}]
  %s1 = inlined_call_operand.hbm [shape: f32[2,8], index: 1, kind: output, shape index: {}]
  %s2 = sld [smem:[#allocation0]]
  $region26: #{tpu_custom_call.1} parent=0
    _
  %s4 = ssub.s32 1, %s2
  %s5 = scalar_select 0, %s4, %s2
  $region1: #{tpu_custom_call.1} parent=0
    #allocation3 [shape = 'u8[8192]{0}', space=vmem, size = 0x2000, scoped, tag = 'input window, operand 0, single buffered']
    #allocation4 [shape = 's32[1]{0}', space=sflag, size = 0x4, scoped, tag = 'scoped memory for tpu_custom_call.1']
    #allocation5 [shape = 's32[1]{0}', space=sflag, size = 0x4, scoped, tag = 'scoped memory for tpu_custom_call.1']
    #allocation6 [shape = 'u8[1024]{0}', space=vmem, size = 0x400, scoped, tag = 'output window, operand 0, single buffered']
    %6 = vsyncpa [#allocation4], 0
    %7 = vsyncpa [#allocation5], 0
    // Predicated region
    $region2: #{tpu_custom_call.1} parent=1 // pred_check
      _
    $region3: #{tpu_custom_call.1} parent=1 // pred_check_branch
      %9 = sbr.rel (0) target = $region5
    $region4: #{tpu_custom_call.1} parent=1 // pred_region
      %s11 = ssub.s32 256, 256
      %12 = vsyncadd [#allocation4], %s11
      %s14 = sshll.u32 [#allocation3], 4
      %s15 = int_to_ptr.vmem [resolvable:$true] %s14
      %17 = dma.hbm_to_vmem [thread:$0]  %s0, 256, %s15, [#allocation4]
    $region5: #{tpu_custom_call.1} parent=1 // pred_fallthru
      _
    // Predicated region
    $region6: #{tpu_custom_call.1} parent=1 // pred_check
      _
    $region7: #{tpu_custom_call.1} parent=1 // pred_check_branch
      %19 = sbr.rel (0) target = $region9
    $region8: #{tpu_custom_call.1} parent=1 // pred_region
      %20 = dma.done [#allocation4], 256
    $region9: #{tpu_custom_call.1} parent=1 // pred_fallthru
      _
    %p21 = scmp.eq.s32.totalorder 0, 0
    // Predicated region
    $region10: #{tpu_custom_call.1} parent=1 // pred_check
      %p22 = pneg %p21
    $region11: #{tpu_custom_call.1} parent=1 // pred_check_branch
      %24 = sbr.rel (%p22) target = $region13
    $region12: #{tpu_custom_call.1} parent=1 // pred_region
      %vm25 = vcmask 57344
      %26 = vst.msk [vmem:[#allocation2] sm:$0x1] %vm25, 0.0
      %27 = vst.msk [vmem:[#allocation2 + $0x1] sm:$0x1] %vm25, -inf
    $region13: #{tpu_custom_call.1} parent=1 // pred_fallthru
      _
    %v28 = vld [vmem:[#allocation3] sm:$0xff]
    %v29 = vld [vmem:[#allocation3 + $0x8] sm:$0xff]
    %v30 = vadd.f32 %v28, %v29
    %31 = vadd.xlane.f32.xlu0 %v30
    %v32 = vpop.xlane.xlu0 %31
    %v33 = vadd.f32 %v32, 0.0
    %v34 = vmax.f32 %v28, %v29
    %35 = vmax.xlane.f32.xlu0 %v34
    %v36 = vpop.xlane.xlu0 %35
    %v37 = vld [vmem:[#allocation2] sm:$0x1]
    %v39 = vlaneseq
    %v40 = vand.u32 %v39, 127
    %v41 = vlaneseq
    %v42 = vshrl.u32 %v41, 7
    %v43 = vsub.s32 %v40, %v42
    %v44 = vrot.slane %v33, %v43
    %v46 = vadd.f32 %v37, %v44
    %vm47 = vcmask 57344
    %48 = vst.msk [vmem:[#allocation2] sm:$0x1] %vm47, %v46
    %v49 = vld [vmem:[#allocation2 + $0x1] sm:$0x1]
    %v51 = vlaneseq
    %v52 = vshrl.u32 %v51, 7
    %v53 = vsub.s32 %v40, %v52
    %v54 = vrot.slane %v36, %v53
    %v56 = vmax.f32 %v49, %v54
    %57 = vst.msk [vmem:[#allocation2 + $0x1] sm:$0x1] %vm47, %v56
    // Predicated region
    $region14: #{tpu_custom_call.1} parent=1 // pred_check
      %p58 = pneg %p21
    $region15: #{tpu_custom_call.1} parent=1 // pred_check_branch
      %60 = sbr.rel (%p58) target = $region17
    $region16: #{tpu_custom_call.1} parent=1 // pred_region
      %v61 = vld [vmem:[#allocation2] sm:$0x1]
      %v62 = vmul.f32 %v61, 0.00390625
      %v63 = vld [vmem:[#allocation2 + $0x1] sm:$0x1]
      %v65 = vrot.slane %v63, 7
      %vm67 = vcmask 1040384
      %v68 = vsel %vm67, %v62, %v65
      %vm69 = vcmask 58368
      %70 = vst.msk [vmem:[#allocation6] sm:$0x3] %vm69, %v68
    $region17: #{tpu_custom_call.1} parent=1 // pred_fallthru
      _
    // Predicated region
    $region18: #{tpu_custom_call.1} parent=1 // pred_check
      _
    $region19: #{tpu_custom_call.1} parent=1 // pred_check_branch
      %72 = sbr.rel (0) target = $region21
    $region20: #{tpu_custom_call.1} parent=1 // pred_region
      %s74 = ssub.s32 32, 32
      %75 = vsyncadd [#allocation5], %s74
      %s77 = sshll.u32 [#allocation6], 4
      %s78 = int_to_ptr.vmem [resolvable:$true] %s77
      %80 = dma.vmem_to_hbm [thread:$0]  %s78, 32, %s1, [#allocation5]
    $region21: #{tpu_custom_call.1} parent=1 // pred_fallthru
      _
    // Predicated region
    $region22: #{tpu_custom_call.1} parent=1 // pred_check
      _
    $region23: #{tpu_custom_call.1} parent=1 // pred_check_branch
      %82 = sbr.rel (0) target = $region25
    $region24: #{tpu_custom_call.1} parent=1 // pred_region
      %83 = dma.done [#allocation5], 32
    $region25: #{tpu_custom_call.1} parent=1 // pred_fallthru
      _
    %84 = vsyncpa [#allocation4], 1
    %85 = vsyncpa [#allocation5], 1

</llo_original>
